<compile_context>
chip_gen: v5e
topology: v5e:2x2
jax: 0.10.0
libtpu: 0.0.40
codegen_flags: <defaults>
</compile_context>

<pallas_src>
import functools

import jax
import jax.numpy as jnp
from jax.experimental import pallas as pl
from jax.experimental.pallas import tpu as pltpu


def _round_up(x, m):
    return (x + m - 1) // m * m


# --------------------------------------------------------------------------
# Pallas kernel: one [TM, K] x [K, Cp] matmul tile + bias
# --------------------------------------------------------------------------
def _linear_kernel(p_ref, w_ref, b_ref, o_ref):
    # p_ref: [TM, K]   patch rows (f32)
    # w_ref: [K, Cp]   linear weight, lane-padded (f32)
    # b_ref: [1, Cp]   bias, lane-padded (f32)
    # o_ref: [TM, Cp]
    y = jnp.dot(p_ref[...], w_ref[...], preferred_element_type=jnp.float32)
    o_ref[...] = (y + b_ref[...]).astype(o_ref.dtype)


def _linear_pallas(patches, w_mat, bias):
    # patches: [M, K], w_mat: [K, Cout], bias: [Cout]  ->  [M, Cout]
    M, K = patches.shape
    Kw, Cout = w_mat.shape
    assert K == Kw

    # Lane-dense output: pad Cout up to a multiple of 128 (zero weight columns
    # and zero bias -> padded channels are exactly zero and sliced off below;
    # there is no cross-channel reduction, so padding cannot change results).
    Cp = _round_up(Cout, 128)
    if Cp != Cout:
        w_mat = jnp.pad(w_mat, ((0, 0), (0, Cp - Cout)))
        bias = jnp.pad(bias, ((0, Cp - Cout),))

    # Row-tile size: large enough to pipeline well, small enough that the
    # double-buffered f32 working set 2*TM*(K+Cp)*4 stays well under ~8 MiB,
    # i.e. comfortably inside the default scoped-VMEM budget on v5e (16 MiB)
    # and v7x (32 MiB of 64 MiB physical).
    vmem_budget = 8 * 1024 * 1024
    tm_cap = vmem_budget // (8 * (K + Cp))
    TM = min(1024, max(8, (tm_cap // 8) * 8))
    TM = min(TM, _round_up(M, 8))
    M_pad = _round_up(M, TM)
    if M_pad != M:
        patches = jnp.pad(patches, ((0, M_pad - M), (0, 0)))

    grid = (M_pad // TM,)

    cost = pl.CostEstimate(
        flops=2 * M_pad * K * Cp,
        transcendentals=0,
        bytes_accessed=4 * (M_pad * K + K * Cp + Cp + M_pad * Cp),
    )

    out = pl.pallas_call(
        _linear_kernel,
        out_shape=jax.ShapeDtypeStruct((M_pad, Cp), jnp.float32),
        grid=grid,
        in_specs=[
            pl.BlockSpec((TM, K), lambda i: (i, 0)),     # streamed patch rows
            pl.BlockSpec((K, Cp), lambda i: (0, 0)),     # weight (replicated)
            pl.BlockSpec((1, Cp), lambda i: (0, 0)),     # bias   (replicated)
        ],
        out_specs=pl.BlockSpec((TM, Cp), lambda i: (i, 0)),
        compiler_params=pltpu.CompilerParams(
            dimension_semantics=("parallel",),           # independent M tiles
            vmem_limit_bytes=32 * 1024 * 1024,
        ),
        cost_estimate=cost,
    )(patches, w_mat, bias.reshape(1, Cp))

    return out[:M, :Cout]


# --------------------------------------------------------------------------
# Forward (jit'ed): unfold-as-reshape/transpose + Pallas linear
# --------------------------------------------------------------------------
@functools.partial(jax.jit, static_argnames=("downscaling_factor",))
def patch_merging_forward(x, weight, bias, *, downscaling_factor):
    d = downscaling_factor
    B, C, H, W = x.shape
    nh, nw = H // d, W // d
    # nn.Unfold(kernel=stride=d, padding=0): non-overlapping d x d patches,
    # flattened feature order = (c, kh, kw)  (channel slowest).
    patches = (
        x.reshape(B, C, nh, d, nw, d)
        .transpose(0, 2, 4, 1, 3, 5)          # [B, nh, nw, C, d, d]
        .reshape(B * nh * nw, C * d * d)      # [M, K]
    )
    w_mat = weight.T                          # [K, Cout]
    out = _linear_pallas(patches, w_mat, bias)
    return out.reshape(B, nh, nw, weight.shape[0])


# --------------------------------------------------------------------------
# Module wrapper (matches torch PatchMerging parameterization)
# --------------------------------------------------------------------------
class PatchMergingPallas:
    """Pallas/JAX equivalent of PatchMerging(in_channels, out_channels, downscaling_factor)."""

    def __init__(self, in_channels, out_channels, downscaling_factor, key):
        self.in_channels = in_channels
        self.out_channels = out_channels
        self.downscaling_factor = downscaling_factor
        k_w, k_b = jax.random.split(key)
        fan_in = in_channels * downscaling_factor ** 2
        bound = 1.0 / (fan_in ** 0.5)
        # nn.Linear default init: U(-1/sqrt(fan_in), 1/sqrt(fan_in))
        self.weight = jax.random.uniform(
            k_w, (out_channels, fan_in), jnp.float32, -bound, bound)
        self.bias = jax.random.uniform(
            k_b, (out_channels,), jnp.float32, -bound, bound)

    def __call__(self, x):
        return patch_merging_forward(
            x, self.weight, self.bias,
            downscaling_factor=self.downscaling_factor)


# --------------------------------------------------------------------------
# Pure-JAX reference (for correctness check)
# --------------------------------------------------------------------------
def _reference(module, x):
    d = module.downscaling_factor
    B, C, H, W = x.shape
    nh, nw = H // d, W // d
    patches = (
        x.reshape(B, C, nh, d, nw, d)
        .transpose(0, 2, 4, 1, 3, 5)
        .reshape(B, nh, nw, C * d * d)
    )
    return patches @ module.weight.T + module.bias


if __name__ == "__main__":
    key = jax.random.PRNGKey(0)
    k_param, k_x = jax.random.split(key)

    B, C_IN, C_OUT, H, W, D = 2, 4, 32, 16, 16, 2
    x = jax.random.normal(k_x, (B, C_IN, H, W), jnp.float32)

    module = PatchMergingPallas(C_IN, C_OUT, D, k_param)

    out = module(x)                                    # [B, H//D, W//D, C_OUT]
    out = jax.block_until_ready(out)

    ref = jax.block_until_ready(_reference(module, x))
    assert out.shape == (B, H // D, W // D, C_OUT), out.shape
    max_err = float(jnp.max(jnp.abs(out - ref)))
    assert max_err < 2e-3, f"mismatch vs reference: {max_err}"

    print("KERNEL_OK")
</pallas_src>

<mosaic_0001>
module attributes {stable_mosaic.version = 11 : i64} {
  func.func @_linear_kernel(%arg0: i32, %arg1: memref<128x16xf32, #tpu.memory_space<vmem>>, %arg2: memref<16x128xf32, #tpu.memory_space<vmem>>, %arg3: memref<1x128xf32, #tpu.memory_space<vmem>>, %arg4: memref<128x128xf32, #tpu.memory_space<vmem>>) attributes {dimension_semantics = [#tpu.dimension_semantics<parallel>], iteration_bounds = array<i64: 1>, scalar_prefetch = 0 : i64, scratch_operands = 0 : i64, tpu.core_type = #tpu.core_type<tc>, window_params = [{transform_indices = @transform_0, window_bounds = array<i64: 128, 16>}, {pipeline_mode = #tpu.pipeline_mode<synchronous>, transform_indices = @transform_1, window_bounds = array<i64: 16, 128>}, {pipeline_mode = #tpu.pipeline_mode<synchronous>, transform_indices = @transform_2, window_bounds = array<i64: 1, 128>}, {transform_indices = @transform_3, window_bounds = array<i64: 128, 128>}]} {
    %c0 = arith.constant 0 : index
    %c0_0 = arith.constant 0 : index
    %0 = vector.load %arg1[%c0, %c0_0] : memref<128x16xf32, #tpu.memory_space<vmem>>, vector<128x16xf32>
    %c0_1 = arith.constant 0 : index
    %c0_2 = arith.constant 0 : index
    %1 = vector.load %arg2[%c0_1, %c0_2] : memref<16x128xf32, #tpu.memory_space<vmem>>, vector<16x128xf32>
    %cst = arith.constant dense<0.000000e+00> : vector<128x128xf32>
    %2 = tpu.matmul %0, %1, %cst {dimension_numbers = #tpu.dot_dimension_numbers<[1], [0], [0], [1], [0, 0, 1, 1], [], []>} : vector<128x16xf32>, vector<16x128xf32>, vector<128x128xf32> -> vector<128x128xf32>
    %c0_3 = arith.constant 0 : index
    %c0_4 = arith.constant 0 : index
    %3 = vector.load %arg3[%c0_3, %c0_4] : memref<1x128xf32, #tpu.memory_space<vmem>>, vector<1x128xf32>
    %4 = vector.broadcast %3 : vector<1x128xf32> to vector<128x128xf32>
    %5 = arith.addf %2, %4 : vector<128x128xf32>
    %c0_5 = arith.constant 0 : index
    %c0_6 = arith.constant 0 : index
    %6 = vector.load %arg4[%c0_5, %c0_6] : memref<128x128xf32, #tpu.memory_space<vmem>>, vector<128x128xf32>
    tpu.vector_store %arg4[%c0_5, %c0_6], %5 {strides = array<i32>} : memref<128x128xf32, #tpu.memory_space<vmem>>, vector<128x128xf32>,
    return
  }
  func.func @transform_0(%arg0: i32) -> (i32, i32) {
    %c0_i32 = arith.constant 0 : i32
    %c0_i32_0 = arith.constant 0 : i32
    return %arg0, %c0_i32 : i32, i32
  }
  func.func @transform_1(%arg0: i32) -> (i32, i32) {
    %c0_i32 = arith.constant 0 : i32
    %c0_i32_0 = arith.constant 0 : i32
    %c0_i32_1 = arith.constant 0 : i32
    return %c0_i32, %c0_i32_0 : i32, i32
  }
  func.func @transform_2(%arg0: i32) -> (i32, i32) {
    %c0_i32 = arith.constant 0 : i32
    %c0_i32_0 = arith.constant 0 : i32
    %c0_i32_1 = arith.constant 0 : i32
    return %c0_i32, %c0_i32_0 : i32, i32
  }
  func.func @transform_3(%arg0: i32) -> (i32, i32) {
    %c0_i32 = arith.constant 0 : i32
    %c0_i32_0 = arith.constant 0 : i32
    return %arg0, %c0_i32 : i32, i32
  }
}

</mosaic_0001>

<llo_original>
// kernel: patch_merging_forward.1
$region0: #{patch_merging_forward.1}
  #allocation0 [shape = 'u32[]', space=smem, size = 0x4, offset = 0x4, fixed_abs, tag = 'smem constant byte address 0x4 - core index']
  #allocation1 [shape = 'u32[72,128]{1,0:T(1,128)}', space=vmem, size = 0x9000, scoped, tag = 'internal scratch']
  %s0 = inlined_call_operand.vmem [shape: f32[128,16], index: 0, kind: input, shape index: {}]
  %s1 = inlined_call_operand.vmem [shape: f32[16,128], index: 1, kind: input, shape index: {}]
  %s2 = inlined_call_operand.vmem [shape: f32[1,128], index: 2, kind: input, shape index: {}]
  %s3 = inlined_call_operand.hbm [shape: f32[128,128], index: 3, kind: output, shape index: {}]
  %s4 = sld [smem:[#allocation0]]
  $region22: #{patch_merging_forward.1} parent=0
    _
  %s6 = ssub.s32 1, %s4
  %s7 = scalar_select 0, %s6, %s4
  $region1: #{patch_merging_forward.1} parent=0
    #allocation2 [shape = 'u8[65536]{0}', space=vmem, size = 0x10000, scoped, tag = 'output window, operand 0, single buffered']
    #allocation3 [shape = 's32[1]{0}', space=sflag, size = 0x4, scoped, tag = 'scoped memory for patch_merging_forward.1']
    %8 = vsyncpa [#allocation3], 0
    // Predicated region
    $region2: #{patch_merging_forward.1} parent=1 // pred_check
      _
    $region3: #{patch_merging_forward.1} parent=1 // pred_check_branch
      %10 = sbr.rel (0) target = $region5
    $region4: #{patch_merging_forward.1} parent=1 // pred_region
      _
    $region5: #{patch_merging_forward.1} parent=1 // pred_fallthru
      _
    // Predicated region
    $region6: #{patch_merging_forward.1} parent=1 // pred_check
      _
    $region7: #{patch_merging_forward.1} parent=1 // pred_check_branch
      %12 = sbr.rel (0) target = $region9
    $region8: #{patch_merging_forward.1} parent=1 // pred_region
      _
    $region9: #{patch_merging_forward.1} parent=1 // pred_fallthru
      _
    // Predicated region
    $region10: #{patch_merging_forward.1} parent=1 // pred_check
      _
    $region11: #{patch_merging_forward.1} parent=1 // pred_check_branch
      %14 = sbr.rel (0) target = $region13
    $region12: #{patch_merging_forward.1} parent=1 // pred_region
      _
    $region13: #{patch_merging_forward.1} parent=1 // pred_fallthru
      _
    %v15 = vld [vmem:[%s0] sm:$0xff]
    %v16 = vld [vmem:[%s0 + $0x8] sm:$0xff]
    %v17 = vld [vmem:[%s0 + $0x10] sm:$0xff]
    %v18 = vld [vmem:[%s0 + $0x18] sm:$0xff]
    %v19 = vld [vmem:[%s0 + $0x20] sm:$0xff]
    %v20 = vld [vmem:[%s0 + $0x28] sm:$0xff]
    %v21 = vld [vmem:[%s0 + $0x30] sm:$0xff]
    %v22 = vld [vmem:[%s0 + $0x38] sm:$0xff]
    %v23 = vld [vmem:[%s0 + $0x40] sm:$0xff]
    %v24 = vld [vmem:[%s0 + $0x48] sm:$0xff]
    %v25 = vld [vmem:[%s0 + $0x50] sm:$0xff]
    %v26 = vld [vmem:[%s0 + $0x58] sm:$0xff]
    %v27 = vld [vmem:[%s0 + $0x60] sm:$0xff]
    %v28 = vld [vmem:[%s0 + $0x68] sm:$0xff]
    %v29 = vld [vmem:[%s0 + $0x70] sm:$0xff]
    %v30 = vld [vmem:[%s0 + $0x78] sm:$0xff]
    %v31 = vld [vmem:[%s1] sm:$0xff]
    %v32 = vld [vmem:[%s1 + $0x8] sm:$0xff]
    %v33 = vld [vmem:[%s2] sm:$0x1]
    %v35 = vperm.slane %v33, 0
    %vm37 = vcmask 130048
    %v39 = vsel %vm37, %v15, 0
    %v42 = vsel %vm37, %v16, 0
    %v45 = vsel %vm37, %v17, 0
    %v48 = vsel %vm37, %v18, 0
    %v51 = vsel %vm37, %v19, 0
    %v54 = vsel %vm37, %v20, 0
    %v57 = vsel %vm37, %v21, 0
    %v60 = vsel %vm37, %v22, 0
    %v63 = vsel %vm37, %v23, 0
    %v66 = vsel %vm37, %v24, 0
    %v69 = vsel %vm37, %v25, 0
    %v72 = vsel %vm37, %v26, 0
    %v75 = vsel %vm37, %v27, 0
    %v78 = vsel %vm37, %v28, 0
    %v81 = vsel %vm37, %v29, 0
    %v84 = vsel %vm37, %v30, 0
    %86 = vmatpush.msra.mxu0 0.0
    %87 = vmatpush.msra.mxu0 0.0
    %88 = vmatpush.msra.mxu0 0.0
    %89 = vmatpush.msra.mxu0 0.0
    %90 = vmatpush.msra.mxu0 0.0
    %91 = vmatpush.msra.mxu0 0.0
    %92 = vmatpush.msra.mxu0 0.0
    %93 = vmatpush.msra.mxu0 0.0
    %94 = vmatpush.msra.mxu0 0.0
    %95 = vmatpush.msra.mxu0 0.0
    %96 = vmatpush.msra.mxu0 0.0
    %97 = vmatpush.msra.mxu0 0.0
    %98 = vmatpush.msra.mxu0 0.0
    %99 = vmatpush.msra.mxu0 0.0
    %100 = vmatpush.msra.mxu0 %v32
    %101 = vmatpush.msra.mxu0 %v31
    %102 = vmatmul.f32.gmra.mxu0 %v39
    %v103 = vpop.f32.mrf.mxu0
    %v104 = vadd.f32 %v35, %v103
    %105 = vmatmul.f32.gmra.mxu0 %v42
    %v106 = vpop.f32.mrf.mxu0
    %v107 = vadd.f32 %v35, %v106
    %108 = vmatmul.f32.gmra.mxu0 %v45
    %v109 = vpop.f32.mrf.mxu0
    %v110 = vadd.f32 %v35, %v109
    %111 = vmatmul.f32.gmra.mxu0 %v48
    %v112 = vpop.f32.mrf.mxu0
    %v113 = vadd.f32 %v35, %v112
    %114 = vmatmul.f32.gmra.mxu0 %v51
    %v115 = vpop.f32.mrf.mxu0
    %v116 = vadd.f32 %v35, %v115
    %117 = vmatmul.f32.gmra.mxu0 %v54
    %v118 = vpop.f32.mrf.mxu0
    %v119 = vadd.f32 %v35, %v118
    %120 = vmatmul.f32.gmra.mxu0 %v57
    %v121 = vpop.f32.mrf.mxu0
    %v122 = vadd.f32 %v35, %v121
    %123 = vmatmul.f32.gmra.mxu0 %v60
    %v124 = vpop.f32.mrf.mxu0
    %v125 = vadd.f32 %v35, %v124
    %126 = vmatmul.f32.gmra.mxu0 %v63
    %v127 = vpop.f32.mrf.mxu0
    %v128 = vadd.f32 %v35, %v127
    %129 = vmatmul.f32.gmra.mxu0 %v66
    %v130 = vpop.f32.mrf.mxu0
    %v131 = vadd.f32 %v35, %v130
    %132 = vmatmul.f32.gmra.mxu0 %v69
    %v133 = vpop.f32.mrf.mxu0
    %v134 = vadd.f32 %v35, %v133
    %135 = vmatmul.f32.gmra.mxu0 %v72
    %v136 = vpop.f32.mrf.mxu0
    %v137 = vadd.f32 %v35, %v136
    %138 = vmatmul.f32.gmra.mxu0 %v75
    %v139 = vpop.f32.mrf.mxu0
    %v140 = vadd.f32 %v35, %v139
    %141 = vmatmul.f32.gmra.mxu0 %v78
    %v142 = vpop.f32.mrf.mxu0
    %v143 = vadd.f32 %v35, %v142
    %144 = vmatmul.f32.gmra.mxu0 %v81
    %v145 = vpop.f32.mrf.mxu0
    %v146 = vadd.f32 %v35, %v145
    %147 = vmatmul.f32.gmra.mxu0 %v84
    %v148 = vpop.f32.mrf.mxu0
    %v149 = vadd.f32 %v35, %v148
    %150 = vdwg.mxu0
    %151 = vst [vmem:[#allocation2] sm:$0xff] %v104
    %152 = vst [vmem:[#allocation2 + $0x8] sm:$0xff] %v107
    %153 = vst [vmem:[#allocation2 + $0x10] sm:$0xff] %v110
    %154 = vst [vmem:[#allocation2 + $0x18] sm:$0xff] %v113
    %155 = vst [vmem:[#allocation2 + $0x20] sm:$0xff] %v116
    %156 = vst [vmem:[#allocation2 + $0x28] sm:$0xff] %v119
    %157 = vst [vmem:[#allocation2 + $0x30] sm:$0xff] %v122
    %158 = vst [vmem:[#allocation2 + $0x38] sm:$0xff] %v125
    %159 = vst [vmem:[#allocation2 + $0x40] sm:$0xff] %v128
    %160 = vst [vmem:[#allocation2 + $0x48] sm:$0xff] %v131
    %161 = vst [vmem:[#allocation2 + $0x50] sm:$0xff] %v134
    %162 = vst [vmem:[#allocation2 + $0x58] sm:$0xff] %v137
    %163 = vst [vmem:[#allocation2 + $0x60] sm:$0xff] %v140
    %164 = vst [vmem:[#allocation2 + $0x68] sm:$0xff] %v143
    %165 = vst [vmem:[#allocation2 + $0x70] sm:$0xff] %v146
    %166 = vst [vmem:[#allocation2 + $0x78] sm:$0xff] %v149
    // Predicated region
    $region14: #{patch_merging_forward.1} parent=1 // pred_check
      _
    $region15: #{patch_merging_forward.1} parent=1 // pred_check_branch
      %168 = sbr.rel (0) target = $region17
    $region16: #{patch_merging_forward.1} parent=1 // pred_region
      %170 = vsyncadd [#allocation3], 0
      %s171 = sshll.u32 [#allocation2], 4
      %s172 = int_to_ptr.vmem [resolvable:$true] %s171
      %s173 = sshll.u32 %s3, 4
      %s174 = int_to_ptr.hbm [resolvable:$true] %s173
      %179 = dma.vmem_to_hbm [thread:$0]  %s172, 2048, %s174, [#allocation3], 128, 128, 8
    $region17: #{patch_merging_forward.1} parent=1 // pred_fallthru
      _
    // Predicated region
    $region18: #{patch_merging_forward.1} parent=1 // pred_check
      _
    $region19: #{patch_merging_forward.1} parent=1 // pred_check_branch
      %181 = sbr.rel (0) target = $region21
    $region20: #{patch_merging_forward.1} parent=1 // pred_region
      %183 = dma.done [#allocation3], 2048
    $region21: #{patch_merging_forward.1} parent=1 // pred_fallthru
      _
    %184 = vsyncpa [#allocation3], 1

</llo_original>
